<compile_context>
chip_gen: v6e
topology: v6e:2x2x1
jax: 0.10.0
libtpu: 0.0.40
codegen_flags: <defaults>
</compile_context>

<pallas_src>
import jax
import jax.numpy as jnp
from jax.experimental import pallas as pl
from jax.experimental.pallas import tpu as pltpu


def mlp_kernel(x_ref,
               w1_ref, b1_ref,
               w2_ref, b2_ref,
               w3_ref, b3_ref,
               w4_ref, b4_ref,
               out_ref):
    """One grid step = one (Bt, d_in) tile of batch rows."""
    # fc1 -> relu   (bf16 MXU matmul, f32 accumulate, f32 epilogue)
    h = jnp.dot(x_ref[...], w1_ref[...], preferred_element_type=jnp.float32)
    h = jnp.maximum(h + b1_ref[...], 0.0)

    # fc2 -> relu
    h = jnp.dot(h.astype(jnp.bfloat16), w2_ref[...],
                preferred_element_type=jnp.float32)
    h = jnp.maximum(h + b2_ref[...], 0.0)

    # fc3 -> relu
    h = jnp.dot(h.astype(jnp.bfloat16), w3_ref[...],
                preferred_element_type=jnp.float32)
    h = jnp.maximum(h + b3_ref[...], 0.0)

    # fc4 (no activation)
    h = jnp.dot(h.astype(jnp.bfloat16), w4_ref[...],
                preferred_element_type=jnp.float32)
    out_ref[...] = (h + b4_ref[...]).astype(out_ref.dtype)


def _const_spec(shape):
    # Full-array block, constant block index -> fetched once, stays resident.
    return pl.BlockSpec(shape, lambda i: tuple(0 for _ in shape))


def mlp_forward(x, params, *, block_rows=128):
    """x: (B, d_in) float32 -> (B, d_out) float32."""
    B, d_in = x.shape
    d_h1 = params["w1"].shape[1]
    d_h2 = params["w2"].shape[1]
    d_h3 = params["w3"].shape[1]
    d_out = params["w4"].shape[1]

    # Pick a batch tile: multiple of 8 sublanes, at most `block_rows`.
    Bt = min(block_rows, max(8, ((B + 7) // 8) * 8))
    pad = (-B) % Bt
    if pad:
        x = jnp.pad(x, ((0, pad), (0, 0)))
    Bp = B + pad
    grid = (Bp // Bt,)

    # bf16 activations/weights into the MXU; f32 biases for the epilogue.
    x_bf16 = x.astype(jnp.bfloat16)
    w = [params[f"w{i}"].astype(jnp.bfloat16) for i in (1, 2, 3, 4)]
    b = [params[f"b{i}"].reshape(1, -1).astype(jnp.float32) for i in (1, 2, 3, 4)]

    args = (x_bf16, w[0], b[0], w[1], b[1], w[2], b[2], w[3], b[3])

    in_specs = [pl.BlockSpec((Bt, d_in), lambda i: (i, 0))]
    in_specs += [_const_spec(a.shape) for a in args[1:]]

    flops = 2 * Bp * (d_in * d_h1 + d_h1 * d_h2 + d_h2 * d_h3 + d_h3 * d_out)
    bytes_accessed = (x_bf16.size * 2
                      + sum(a.size * 2 for a in w)
                      + sum(a.size * 4 for a in b)
                      + Bp * d_out * 4)

    out = pl.pallas_call(
        mlp_kernel,
        out_shape=jax.ShapeDtypeStruct((Bp, d_out), jnp.float32),
        grid_spec=pltpu.PrefetchScalarGridSpec(
            num_scalar_prefetch=0,
            grid=grid,
            in_specs=in_specs,
            out_specs=pl.BlockSpec((Bt, d_out), lambda i: (i, 0)),
        ),
        compiler_params=pltpu.CompilerParams(
            dimension_semantics=("parallel",)),
        cost_estimate=pl.CostEstimate(
            flops=flops, transcendentals=0, bytes_accessed=bytes_accessed),
    )(*args)
    return out[:B]


def make_params(key, input_dim, hidden_dim, output_dim):
    """Deterministic synthetic parameters matching SimpleMLP's shapes.

    PyTorch nn.Linear stores weight as (out_features, in_features); we keep
    the transposed (in, out) layout for the row-major (B, in) @ (in, out) form.
    """
    dims = [(input_dim, hidden_dim),
            (hidden_dim, hidden_dim // 2),
            (hidden_dim // 2, hidden_dim // 8),
            (hidden_dim // 8, output_dim)]
    ks = jax.random.split(key, 8)
    p = {}
    for i, (ci, co) in enumerate(dims, start=1):
        p[f"w{i}"] = (jax.random.normal(ks[2 * i - 2], (ci, co), jnp.float32)
                      * (1.0 / jnp.sqrt(ci)))
        p[f"b{i}"] = jax.random.normal(ks[2 * i - 1], (co,), jnp.float32) * 0.05
    return p


def reference_forward(x, params):
    """Pure-JAX f32 reference mirroring the PyTorch forward."""
    h = jax.nn.relu(x @ params["w1"] + params["b1"])
    h = jax.nn.relu(h @ params["w2"] + params["b2"])
    h = jax.nn.relu(h @ params["w3"] + params["b3"])
    return h @ params["w4"] + params["b4"]


if __name__ == "__main__":
    B, INPUT_DIM, HIDDEN_DIM, OUTPUT_DIM = 8, 16, 64, 8
    key = jax.random.PRNGKey(0)
    kx, kp = jax.random.split(key)

    x = jax.random.normal(kx, (B, INPUT_DIM), jnp.float32)
    params = make_params(kp, INPUT_DIM, HIDDEN_DIM, OUTPUT_DIM)

    out = jax.block_until_ready(mlp_forward(x, params))
    assert out.shape == (B, OUTPUT_DIM), out.shape

    ref = jax.block_until_ready(reference_forward(x, params))
    # bf16 MXU inputs with f32 accumulation -> loosened tolerance.
    assert jnp.allclose(out, ref, atol=5e-2, rtol=5e-2), (
        float(jnp.max(jnp.abs(out - ref))))

    print("KERNEL_OK")
</pallas_src>

<mosaic_0001>
module attributes {stable_mosaic.version = 11 : i64} {
  func.func @mlp_kernel(%arg0: i32, %arg1: memref<8x16xbf16, #tpu.memory_space<vmem>>, %arg2: memref<16x64xbf16, #tpu.memory_space<vmem>>, %arg3: memref<1x64xf32, #tpu.memory_space<vmem>>, %arg4: memref<64x32xbf16, #tpu.memory_space<vmem>>, %arg5: memref<1x32xf32, #tpu.memory_space<vmem>>, %arg6: memref<32x8xbf16, #tpu.memory_space<vmem>>, %arg7: memref<1x8xf32, #tpu.memory_space<vmem>>, %arg8: memref<8x8xbf16, #tpu.memory_space<vmem>>, %arg9: memref<1x8xf32, #tpu.memory_space<vmem>>, %arg10: memref<8x8xf32, #tpu.memory_space<vmem>>) attributes {dimension_semantics = [#tpu.dimension_semantics<parallel>], iteration_bounds = array<i64: 1>, scalar_prefetch = 0 : i64, scratch_operands = 0 : i64, tpu.core_type = #tpu.core_type<tc>, window_params = [{transform_indices = @transform_0, window_bounds = array<i64: 8, 16>}, {pipeline_mode = #tpu.pipeline_mode<synchronous>, transform_indices = @transform_1, window_bounds = array<i64: 16, 64>}, {pipeline_mode = #tpu.pipeline_mode<synchronous>, transform_indices = @transform_2, window_bounds = array<i64: 1, 64>}, {pipeline_mode = #tpu.pipeline_mode<synchronous>, transform_indices = @transform_3, window_bounds = array<i64: 64, 32>}, {pipeline_mode = #tpu.pipeline_mode<synchronous>, transform_indices = @transform_4, window_bounds = array<i64: 1, 32>}, {pipeline_mode = #tpu.pipeline_mode<synchronous>, transform_indices = @transform_5, window_bounds = array<i64: 32, 8>}, {pipeline_mode = #tpu.pipeline_mode<synchronous>, transform_indices = @transform_6, window_bounds = array<i64: 1, 8>}, {pipeline_mode = #tpu.pipeline_mode<synchronous>, transform_indices = @transform_7, window_bounds = array<i64: 8, 8>}, {pipeline_mode = #tpu.pipeline_mode<synchronous>, transform_indices = @transform_8, window_bounds = array<i64: 1, 8>}, {transform_indices = @transform_9, window_bounds = array<i64: 8, 8>}]} {
    %c0 = arith.constant 0 : index
    %c0_0 = arith.constant 0 : index
    %0 = vector.load %arg1[%c0, %c0_0] : memref<8x16xbf16, #tpu.memory_space<vmem>>, vector<8x16xbf16>
    %c0_1 = arith.constant 0 : index
    %c0_2 = arith.constant 0 : index
    %1 = vector.load %arg2[%c0_1, %c0_2] : memref<16x64xbf16, #tpu.memory_space<vmem>>, vector<16x64xbf16>
    %cst = arith.constant dense<0.000000e+00> : vector<8x64xf32>
    %2 = tpu.matmul %0, %1, %cst {dimension_numbers = #tpu.dot_dimension_numbers<[1], [0], [0], [1], [0, 0, 1, 1], [], []>} : vector<8x16xbf16>, vector<16x64xbf16>, vector<8x64xf32> -> vector<8x64xf32>
    %c0_3 = arith.constant 0 : index
    %c0_4 = arith.constant 0 : index
    %3 = vector.load %arg3[%c0_3, %c0_4] : memref<1x64xf32, #tpu.memory_space<vmem>>, vector<1x64xf32>
    %4 = vector.broadcast %3 : vector<1x64xf32> to vector<8x64xf32>
    %5 = arith.addf %2, %4 : vector<8x64xf32>
    %cst_5 = arith.constant 0.000000e+00 : f32
    %6 = vector.broadcast %cst_5 : f32 to vector<8x64xf32>
    %7 = arith.maximumf %5, %6 : vector<8x64xf32>
    %8 = arith.truncf %7 : vector<8x64xf32> to vector<8x64xbf16>
    %c0_6 = arith.constant 0 : index
    %c0_7 = arith.constant 0 : index
    %9 = vector.load %arg4[%c0_6, %c0_7] : memref<64x32xbf16, #tpu.memory_space<vmem>>, vector<64x32xbf16>
    %cst_8 = arith.constant dense<0.000000e+00> : vector<8x32xf32>
    %10 = tpu.matmul %8, %9, %cst_8 {dimension_numbers = #tpu.dot_dimension_numbers<[1], [0], [0], [1], [0, 0, 1, 1], [], []>} : vector<8x64xbf16>, vector<64x32xbf16>, vector<8x32xf32> -> vector<8x32xf32>
    %c0_9 = arith.constant 0 : index
    %c0_10 = arith.constant 0 : index
    %11 = vector.load %arg5[%c0_9, %c0_10] : memref<1x32xf32, #tpu.memory_space<vmem>>, vector<1x32xf32>
    %12 = vector.broadcast %11 : vector<1x32xf32> to vector<8x32xf32>
    %13 = arith.addf %10, %12 : vector<8x32xf32>
    %cst_11 = arith.constant 0.000000e+00 : f32
    %14 = vector.broadcast %cst_11 : f32 to vector<8x32xf32>
    %15 = arith.maximumf %13, %14 : vector<8x32xf32>
    %16 = arith.truncf %15 : vector<8x32xf32> to vector<8x32xbf16>
    %c0_12 = arith.constant 0 : index
    %c0_13 = arith.constant 0 : index
    %17 = vector.load %arg6[%c0_12, %c0_13] : memref<32x8xbf16, #tpu.memory_space<vmem>>, vector<32x8xbf16>
    %cst_14 = arith.constant dense<0.000000e+00> : vector<8x8xf32>
    %18 = tpu.matmul %16, %17, %cst_14 {dimension_numbers = #tpu.dot_dimension_numbers<[1], [0], [0], [1], [0, 0, 1, 1], [], []>} : vector<8x32xbf16>, vector<32x8xbf16>, vector<8x8xf32> -> vector<8x8xf32>
    %c0_15 = arith.constant 0 : index
    %c0_16 = arith.constant 0 : index
    %19 = vector.load %arg7[%c0_15, %c0_16] : memref<1x8xf32, #tpu.memory_space<vmem>>, vector<1x8xf32>
    %20 = vector.broadcast %19 : vector<1x8xf32> to vector<8x8xf32>
    %21 = arith.addf %18, %20 : vector<8x8xf32>
    %cst_17 = arith.constant 0.000000e+00 : f32
    %22 = vector.broadcast %cst_17 : f32 to vector<8x8xf32>
    %23 = arith.maximumf %21, %22 : vector<8x8xf32>
    %24 = arith.truncf %23 : vector<8x8xf32> to vector<8x8xbf16>
    %c0_18 = arith.constant 0 : index
    %c0_19 = arith.constant 0 : index
    %25 = vector.load %arg8[%c0_18, %c0_19] : memref<8x8xbf16, #tpu.memory_space<vmem>>, vector<8x8xbf16>
    %cst_20 = arith.constant dense<0.000000e+00> : vector<8x8xf32>
    %26 = tpu.matmul %24, %25, %cst_20 {dimension_numbers = #tpu.dot_dimension_numbers<[1], [0], [0], [1], [0, 0, 1, 1], [], []>} : vector<8x8xbf16>, vector<8x8xbf16>, vector<8x8xf32> -> vector<8x8xf32>
    %c0_21 = arith.constant 0 : index
    %c0_22 = arith.constant 0 : index
    %27 = vector.load %arg9[%c0_21, %c0_22] : memref<1x8xf32, #tpu.memory_space<vmem>>, vector<1x8xf32>
    %28 = vector.broadcast %27 : vector<1x8xf32> to vector<8x8xf32>
    %29 = arith.addf %26, %28 : vector<8x8xf32>
    %c0_23 = arith.constant 0 : index
    %c0_24 = arith.constant 0 : index
    %30 = vector.load %arg10[%c0_23, %c0_24] : memref<8x8xf32, #tpu.memory_space<vmem>>, vector<8x8xf32>
    tpu.vector_store %arg10[%c0_23, %c0_24], %29 {strides = array<i32>} : memref<8x8xf32, #tpu.memory_space<vmem>>, vector<8x8xf32>,
    return
  }
  func.func @transform_0(%arg0: i32) -> (i32, i32) {
    %c0_i32 = arith.constant 0 : i32
    %c0_i32_0 = arith.constant 0 : i32
    return %arg0, %c0_i32 : i32, i32
  }
  func.func @transform_1(%arg0: i32) -> (i32, i32) {
    %c0_i32 = arith.constant 0 : i32
    %c0_i32_0 = arith.constant 0 : i32
    %c0_i32_1 = arith.constant 0 : i32
    return %c0_i32, %c0_i32_0 : i32, i32
  }
  func.func @transform_2(%arg0: i32) -> (i32, i32) {
    %c0_i32 = arith.constant 0 : i32
    %c0_i32_0 = arith.constant 0 : i32
    %c0_i32_1 = arith.constant 0 : i32
    return %c0_i32, %c0_i32_0 : i32, i32
  }
  func.func @transform_3(%arg0: i32) -> (i32, i32) {
    %c0_i32 = arith.constant 0 : i32
    %c0_i32_0 = arith.constant 0 : i32
    %c0_i32_1 = arith.constant 0 : i32
    return %c0_i32, %c0_i32_0 : i32, i32
  }
  func.func @transform_4(%arg0: i32) -> (i32, i32) {
    %c0_i32 = arith.constant 0 : i32
    %c0_i32_0 = arith.constant 0 : i32
    %c0_i32_1 = arith.constant 0 : i32
    return %c0_i32, %c0_i32_0 : i32, i32
  }
  func.func @transform_5(%arg0: i32) -> (i32, i32) {
    %c0_i32 = arith.constant 0 : i32
    %c0_i32_0 = arith.constant 0 : i32
    %c0_i32_1 = arith.constant 0 : i32
    return %c0_i32, %c0_i32_0 : i32, i32
  }
  func.func @transform_6(%arg0: i32) -> (i32, i32) {
    %c0_i32 = arith.constant 0 : i32
    %c0_i32_0 = arith.constant 0 : i32
    %c0_i32_1 = arith.constant 0 : i32
    return %c0_i32, %c0_i32_0 : i32, i32
  }
  func.func @transform_7(%arg0: i32) -> (i32, i32) {
    %c0_i32 = arith.constant 0 : i32
    %c0_i32_0 = arith.constant 0 : i32
    %c0_i32_1 = arith.constant 0 : i32
    return %c0_i32, %c0_i32_0 : i32, i32
  }
  func.func @transform_8(%arg0: i32) -> (i32, i32) {
    %c0_i32 = arith.constant 0 : i32
    %c0_i32_0 = arith.constant 0 : i32
    %c0_i32_1 = arith.constant 0 : i32
    return %c0_i32, %c0_i32_0 : i32, i32
  }
  func.func @transform_9(%arg0: i32) -> (i32, i32) {
    %c0_i32 = arith.constant 0 : i32
    %c0_i32_0 = arith.constant 0 : i32
    return %arg0, %c0_i32 : i32, i32
  }
}

</mosaic_0001>

<llo_original>
// kernel: tpu_custom_call.1
$region0: #{tpu_custom_call.1}
  #allocation0 [shape = 'u32[]', space=smem, size = 0x4, offset = 0x4, fixed_abs, tag = 'smem constant byte address 0x4 - core index']
  #allocation1 [shape = 'u32[144,128]{1,0:T(1,128)}', space=vmem, size = 0x12000, scoped, tag = 'internal scratch']
  %s0 = inlined_call_operand.vmem [shape: bf16[8,16], index: 0, kind: input, shape index: {}]
  %s1 = inlined_call_operand.vmem [shape: bf16[16,64], index: 1, kind: input, shape index: {}]
  %s2 = inlined_call_operand.vmem [shape: f32[1,64], index: 2, kind: input, shape index: {}]
  %s3 = inlined_call_operand.vmem [shape: bf16[64,32], index: 3, kind: input, shape index: {}]
  %s4 = inlined_call_operand.vmem [shape: f32[1,32], index: 4, kind: input, shape index: {}]
  %s5 = inlined_call_operand.vmem [shape: bf16[32,8], index: 5, kind: input, shape index: {}]
  %s6 = inlined_call_operand.vmem [shape: f32[1,8], index: 6, kind: input, shape index: {}]
  %s7 = inlined_call_operand.vmem [shape: bf16[8,8], index: 7, kind: input, shape index: {}]
  %s8 = inlined_call_operand.vmem [shape: f32[1,8], index: 8, kind: input, shape index: {}]
  %s9 = inlined_call_operand.hbm [shape: f32[8,8], index: 9, kind: output, shape index: {}]
  %s10 = sld [smem:[#allocation0]]
  $region46: #{tpu_custom_call.1} parent=0
    _
  %s12 = ssub.s32 1, %s10
  %s13 = scalar_select 0, %s12, %s10
  $region1: #{tpu_custom_call.1} parent=0
    #allocation2 [shape = 'u8[4096]{0}', space=vmem, size = 0x1000, scoped, tag = 'output window, operand 0, single buffered']
    #allocation3 [shape = 's32[1]{0}', space=sflag, size = 0x4, scoped, tag = 'scoped memory for tpu_custom_call.1']
    %14 = vsyncpa [#allocation3], 0
    // Predicated region
    $region2: #{tpu_custom_call.1} parent=1 // pred_check
      _
    $region3: #{tpu_custom_call.1} parent=1 // pred_check_branch
      %16 = sbr.rel (0) target = $region5
    $region4: #{tpu_custom_call.1} parent=1 // pred_region
      _
    $region5: #{tpu_custom_call.1} parent=1 // pred_fallthru
      _
    // Predicated region
    $region6: #{tpu_custom_call.1} parent=1 // pred_check
      _
    $region7: #{tpu_custom_call.1} parent=1 // pred_check_branch
      %18 = sbr.rel (0) target = $region9
    $region8: #{tpu_custom_call.1} parent=1 // pred_region
      _
    $region9: #{tpu_custom_call.1} parent=1 // pred_fallthru
      _
    // Predicated region
    $region10: #{tpu_custom_call.1} parent=1 // pred_check
      _
    $region11: #{tpu_custom_call.1} parent=1 // pred_check_branch
      %20 = sbr.rel (0) target = $region13
    $region12: #{tpu_custom_call.1} parent=1 // pred_region
      _
    $region13: #{tpu_custom_call.1} parent=1 // pred_fallthru
      _
    // Predicated region
    $region14: #{tpu_custom_call.1} parent=1 // pred_check
      _
    $region15: #{tpu_custom_call.1} parent=1 // pred_check_branch
      %22 = sbr.rel (0) target = $region17
    $region16: #{tpu_custom_call.1} parent=1 // pred_region
      _
    $region17: #{tpu_custom_call.1} parent=1 // pred_fallthru
      _
    // Predicated region
    $region18: #{tpu_custom_call.1} parent=1 // pred_check
      _
    $region19: #{tpu_custom_call.1} parent=1 // pred_check_branch
      %24 = sbr.rel (0) target = $region21
    $region20: #{tpu_custom_call.1} parent=1 // pred_region
      _
    $region21: #{tpu_custom_call.1} parent=1 // pred_fallthru
      _
    // Predicated region
    $region22: #{tpu_custom_call.1} parent=1 // pred_check
      _
    $region23: #{tpu_custom_call.1} parent=1 // pred_check_branch
      %26 = sbr.rel (0) target = $region25
    $region24: #{tpu_custom_call.1} parent=1 // pred_region
      _
    $region25: #{tpu_custom_call.1} parent=1 // pred_fallthru
      _
    // Predicated region
    $region26: #{tpu_custom_call.1} parent=1 // pred_check
      _
    $region27: #{tpu_custom_call.1} parent=1 // pred_check_branch
      %28 = sbr.rel (0) target = $region29
    $region28: #{tpu_custom_call.1} parent=1 // pred_region
      _
    $region29: #{tpu_custom_call.1} parent=1 // pred_fallthru
      _
    // Predicated region
    $region30: #{tpu_custom_call.1} parent=1 // pred_check
      _
    $region31: #{tpu_custom_call.1} parent=1 // pred_check_branch
      %30 = sbr.rel (0) target = $region33
    $region32: #{tpu_custom_call.1} parent=1 // pred_region
      _
    $region33: #{tpu_custom_call.1} parent=1 // pred_fallthru
      _
    // Predicated region
    $region34: #{tpu_custom_call.1} parent=1 // pred_check
      _
    $region35: #{tpu_custom_call.1} parent=1 // pred_check_branch
      %32 = sbr.rel (0) target = $region37
    $region36: #{tpu_custom_call.1} parent=1 // pred_region
      _
    $region37: #{tpu_custom_call.1} parent=1 // pred_fallthru
      _
    %v34 = vld [vmem:[%s0] sm:$0xf]
    %v35 = vld [vmem:[%s1] sm:$0xf]
    %v36 = vld [vmem:[%s1 + $0x4] sm:$0xf]
    %v37 = vld [vmem:[%s2] sm:$0x1]
    %v39 = vlaneseq
    %v40 = vshrl.u32 %v39, 7
    %v41 = vsub.s32 0, %v40
    %v42 = vrot.slane %v37, %v41
    %v46 = vunpack.c.l.b16 %v35
    %v47 = vunpack.c.l.b16 %v36
    %v48 = vpack.c.b16 %v47, %v46
    %vm50 = vcmask 130048
    %v52 = vsel %vm50, %v34, 0
    %54 = vmatprep.subr.bf16.mxu0 0
    %55 = vmatpush1.bf16.msra.mxu0 0
    %56 = vmatprep.subr.bf16.mxu0 0
    %57 = vmatpush1.bf16.msra.mxu0 0
    %58 = vmatprep.subr.bf16.mxu0 0
    %59 = vmatpush1.bf16.msra.mxu0 0
    %60 = vmatprep.subr.bf16.mxu0 0
    %61 = vmatpush1.bf16.msra.mxu0 0
    %62 = vmatprep.subr.bf16.mxu0 0
    %63 = vmatpush1.bf16.msra.mxu0 0
    %64 = vmatprep.subr.bf16.mxu0 0
    %65 = vmatpush1.bf16.msra.mxu0 0
    %66 = vmatprep.subr.bf16.mxu0 0
    %67 = vmatpush1.bf16.msra.mxu0 0
    %68 = vmatprep.subr.bf16.mxu0 0
    %69 = vmatpush1.bf16.msra.mxu0 %v48
    %70 = vmatprep.subr.bf16.mxu0 0
    %71 = vmatpush2.bf16.msra.mxu0 0
    %72 = vmatprep.subr.bf16.mxu0 0
    %73 = vmatpush2.bf16.msra.mxu0 0
    %74 = vmatprep.subr.bf16.mxu0 0
    %75 = vmatpush2.bf16.msra.mxu0 0
    %76 = vmatprep.subr.bf16.mxu0 0
    %77 = vmatpush2.bf16.msra.mxu0 0
    %78 = vmatprep.subr.bf16.mxu0 0
    %79 = vmatpush2.bf16.msra.mxu0 0
    %80 = vmatprep.subr.bf16.mxu0 0
    %81 = vmatpush2.bf16.msra.mxu0 0
    %82 = vmatprep.subr.bf16.mxu0 0
    %83 = vmatpush2.bf16.msra.mxu0 0
    %84 = vmatprep.subr.bf16.mxu0 0
    %85 = vmatpush2.bf16.msra.mxu0 0
    %86 = vmatprep.mubr.bf16.mxu0 0
    %87 = vmatmul.mubr.bf16.gmra.mxu0 %v52
    %v88 = vpop.f32.mrf.mxu0
    %v89 = vadd.f32 %v42, %v88
    %v90 = vpop.f32.mrf.mxu0
    %v91 = vpop.f32.mrf.mxu0
    %v92 = vpop.f32.mrf.mxu0
    %93 = vdwg.mxu0
    %v94 = vmax.f32 %v89, 0.0
    %v95 = vpack.c.bf16 %v94, %v94
    %v96 = vld [vmem:[%s3] sm:$0xf]
    %v97 = vld [vmem:[%s3 + $0x4] sm:$0xf]
    %v98 = vld [vmem:[%s3 + $0x8] sm:$0xf]
    %v99 = vld [vmem:[%s3 + $0xc] sm:$0xf]
    %v100 = vld [vmem:[%s3 + $0x10] sm:$0xf]
    %v101 = vld [vmem:[%s3 + $0x14] sm:$0xf]
    %v102 = vld [vmem:[%s3 + $0x18] sm:$0xf]
    %v103 = vld [vmem:[%s3 + $0x1c] sm:$0xf]
    %v104 = vld [vmem:[%s4] sm:$0x1]
    %v106 = vlaneseq
    %v107 = vshrl.u32 %v106, 7
    %v108 = vsub.s32 0, %v107
    %v109 = vrot.slane %v104, %v108
    %v119 = vunpack.c.l.b16 %v96
    %v120 = vunpack.c.l.b16 %v97
    %v121 = vunpack.c.l.b16 %v98
    %v122 = vunpack.c.l.b16 %v99
    %v123 = vunpack.c.l.b16 %v100
    %v124 = vunpack.c.l.b16 %v101
    %v125 = vunpack.c.l.b16 %v102
    %v126 = vunpack.c.l.b16 %v103
    %v127 = vpack.c.b16 %v120, %v119
    %v128 = vpack.c.b16 %v122, %v121
    %v129 = vpack.c.b16 %v124, %v123
    %v130 = vpack.c.b16 %v126, %v125
    %vm135 = vcmask 523264
    %v137 = vsel %vm135, %v95, 0
    %139 = vmatprep.subr.bf16.mxu0 0
    %140 = vmatpush1.bf16.msra.mxu0 0
    %141 = vmatprep.subr.bf16.mxu0 0
    %142 = vmatpush1.bf16.msra.mxu0 0
    %143 = vmatprep.subr.bf16.mxu0 0
    %144 = vmatpush1.bf16.msra.mxu0 0
    %145 = vmatprep.subr.bf16.mxu0 0
    %146 = vmatpush1.bf16.msra.mxu0 0
    %147 = vmatprep.subr.bf16.mxu0 0
    %148 = vmatpush1.bf16.msra.mxu0 %v130
    %149 = vmatprep.subr.bf16.mxu0 0
    %150 = vmatpush1.bf16.msra.mxu0 %v129
    %151 = vmatprep.subr.bf16.mxu0 0
    %152 = vmatpush1.bf16.msra.mxu0 %v128
    %153 = vmatprep.subr.bf16.mxu0 0
    %154 = vmatpush1.bf16.msra.mxu0 %v127
    %155 = vmatprep.subr.bf16.mxu0 0
    %156 = vmatpush2.bf16.msra.mxu0 0
    %157 = vmatprep.subr.bf16.mxu0 0
    %158 = vmatpush2.bf16.msra.mxu0 0
    %159 = vmatprep.subr.bf16.mxu0 0
    %160 = vmatpush2.bf16.msra.mxu0 0
    %161 = vmatprep.subr.bf16.mxu0 0
    %162 = vmatpush2.bf16.msra.mxu0 0
    %163 = vmatprep.subr.bf16.mxu0 0
    %164 = vmatpush2.bf16.msra.mxu0 0
    %165 = vmatprep.subr.bf16.mxu0 0
    %166 = vmatpush2.bf16.msra.mxu0 0
    %167 = vmatprep.subr.bf16.mxu0 0
    %168 = vmatpush2.bf16.msra.mxu0 0
    %169 = vmatprep.subr.bf16.mxu0 0
    %170 = vmatpush2.bf16.msra.mxu0 0
    %171 = vmatprep.mubr.bf16.mxu0 0
    %172 = vmatmul.mubr.bf16.gmra.mxu0 %v137
    %v173 = vpop.f32.mrf.mxu0
    %v174 = vadd.f32 %v109, %v173
    %v175 = vpop.f32.mrf.mxu0
    %v176 = vpop.f32.mrf.mxu0
    %v177 = vpop.f32.mrf.mxu0
    %178 = vdwg.mxu0
    %v179 = vmax.f32 %v174, 0.0
    %v180 = vpack.c.bf16 %v179, %v179
    %v181 = vld [vmem:[%s5] sm:$0xf]
    %v182 = vld [vmem:[%s5 + $0x4] sm:$0xf]
    %v183 = vld [vmem:[%s5 + $0x8] sm:$0xf]
    %v184 = vld [vmem:[%s5 + $0xc] sm:$0xf]
    %v185 = vld [vmem:[%s6] sm:$0x1]
    %v187 = vlaneseq
    %v188 = vshrl.u32 %v187, 7
    %v189 = vsub.s32 0, %v188
    %v190 = vrot.slane %v185, %v189
    %v196 = vunpack.c.l.b16 %v181
    %v197 = vunpack.c.l.b16 %v182
    %v198 = vunpack.c.l.b16 %v183
    %v199 = vunpack.c.l.b16 %v184
    %v200 = vpack.c.b16 %v197, %v196
    %v201 = vpack.c.b16 %v199, %v198
    %vm204 = vcmask 261120
    %v206 = vsel %vm204, %v180, 0
    %208 = vmatprep.subr.bf16.mxu0 0
    %209 = vmatpush1.bf16.msra.mxu0 0
    %210 = vmatprep.subr.bf16.mxu0 0
    %211 = vmatpush1.bf16.msra.mxu0 0
    %212 = vmatprep.subr.bf16.mxu0 0
    %213 = vmatpush1.bf16.msra.mxu0 0
    %214 = vmatprep.subr.bf16.mxu0 0
    %215 = vmatpush1.bf16.msra.mxu0 0
    %216 = vmatprep.subr.bf16.mxu0 0
    %217 = vmatpush1.bf16.msra.mxu0 0
    %218 = vmatprep.subr.bf16.mxu0 0
    %219 = vmatpush1.bf16.msra.mxu0 0
    %220 = vmatprep.subr.bf16.mxu0 0
    %221 = vmatpush1.bf16.msra.mxu0 %v201
    %222 = vmatprep.subr.bf16.mxu0 0
    %223 = vmatpush1.bf16.msra.mxu0 %v200
    %224 = vmatprep.subr.bf16.mxu0 0
    %225 = vmatpush2.bf16.msra.mxu0 0
    %226 = vmatprep.subr.bf16.mxu0 0
    %227 = vmatpush2.bf16.msra.mxu0 0
    %228 = vmatprep.subr.bf16.mxu0 0
    %229 = vmatpush2.bf16.msra.mxu0 0
    %230 = vmatprep.subr.bf16.mxu0 0
    %231 = vmatpush2.bf16.msra.mxu0 0
    %232 = vmatprep.subr.bf16.mxu0 0
    %233 = vmatpush2.bf16.msra.mxu0 0
    %234 = vmatprep.subr.bf16.mxu0 0
    %235 = vmatpush2.bf16.msra.mxu0 0
    %236 = vmatprep.subr.bf16.mxu0 0
    %237 = vmatpush2.bf16.msra.mxu0 0
    %238 = vmatprep.subr.bf16.mxu0 0
    %239 = vmatpush2.bf16.msra.mxu0 0
    %240 = vmatprep.mubr.bf16.mxu0 0
    %241 = vmatmul.mubr.bf16.gmra.mxu0 %v206
    %v242 = vpop.f32.mrf.mxu0
    %v243 = vadd.f32 %v190, %v242
    %v244 = vpop.f32.mrf.mxu0
    %v245 = vpop.f32.mrf.mxu0
    %v246 = vpop.f32.mrf.mxu0
    %247 = vdwg.mxu0
    %v248 = vmax.f32 %v243, 0.0
    %v249 = vpack.c.bf16 %v248, %v248
    %v250 = vld [vmem:[%s7] sm:$0xf]
    %v251 = vld [vmem:[%s8] sm:$0x1]
    %v253 = vlaneseq
    %v254 = vshrl.u32 %v253, 7
    %v255 = vsub.s32 0, %v254
    %v256 = vrot.slane %v251, %v255
    %vm258 = vcmask 64512
    %v260 = vsel %vm258, %v249, 0
    %vm262 = vcmask 1043456
    %v264 = vsel %vm262, %v250, 0
    %266 = vmatprep.subr.bf16.mxu0 0
    %267 = vmatpush1.bf16.msra.mxu0 0
    %268 = vmatprep.subr.bf16.mxu0 0
    %269 = vmatpush1.bf16.msra.mxu0 0
    %270 = vmatprep.subr.bf16.mxu0 0
    %271 = vmatpush1.bf16.msra.mxu0 0
    %272 = vmatprep.subr.bf16.mxu0 0
    %273 = vmatpush1.bf16.msra.mxu0 0
    %274 = vmatprep.subr.bf16.mxu0 0
    %275 = vmatpush1.bf16.msra.mxu0 0
    %276 = vmatprep.subr.bf16.mxu0 0
    %277 = vmatpush1.bf16.msra.mxu0 0
    %278 = vmatprep.subr.bf16.mxu0 0
    %279 = vmatpush1.bf16.msra.mxu0 0
    %280 = vmatprep.subr.bf16.mxu0 0
    %281 = vmatpush1.bf16.msra.mxu0 %v264
    %282 = vmatprep.subr.bf16.mxu0 0
    %283 = vmatpush2.bf16.msra.mxu0 0
    %284 = vmatprep.subr.bf16.mxu0 0
    %285 = vmatpush2.bf16.msra.mxu0 0
    %286 = vmatprep.subr.bf16.mxu0 0
    %287 = vmatpush2.bf16.msra.mxu0 0
    %288 = vmatprep.subr.bf16.mxu0 0
    %289 = vmatpush2.bf16.msra.mxu0 0
    %290 = vmatprep.subr.bf16.mxu0 0
    %291 = vmatpush2.bf16.msra.mxu0 0
    %292 = vmatprep.subr.bf16.mxu0 0
    %293 = vmatpush2.bf16.msra.mxu0 0
    %294 = vmatprep.subr.bf16.mxu0 0
    %295 = vmatpush2.bf16.msra.mxu0 0
    %296 = vmatprep.subr.bf16.mxu0 0
    %297 = vmatpush2.bf16.msra.mxu0 0
    %298 = vmatprep.mubr.bf16.mxu0 0
    %299 = vmatmul.mubr.bf16.gmra.mxu0 %v260
    %v300 = vpop.f32.mrf.mxu0
    %v301 = vadd.f32 %v256, %v300
    %v302 = vpop.f32.mrf.mxu0
    %v303 = vpop.f32.mrf.mxu0
    %v304 = vpop.f32.mrf.mxu0
    %305 = vdwg.mxu0
    %306 = vst.msk [vmem:[#allocation2] sm:$0xff] %vm258, %v301
    // Predicated region
    $region38: #{tpu_custom_call.1} parent=1 // pred_check
      _
    $region39: #{tpu_custom_call.1} parent=1 // pred_check_branch
      %308 = sbr.rel (0) target = $region41
    $region40: #{tpu_custom_call.1} parent=1 // pred_region
      %s310 = ssub.s32 128, 128
      %311 = vsyncadd [#allocation3], %s310
      %s313 = sshll.u32 [#allocation2], 4
      %s314 = int_to_ptr.vmem [resolvable:$true] %s313
      %316 = dma.vmem_to_hbm [thread:$0]  %s314, 128, %s9, [#allocation3]
    $region41: #{tpu_custom_call.1} parent=1 // pred_fallthru
      _
    // Predicated region
    $region42: #{tpu_custom_call.1} parent=1 // pred_check
      _
    $region43: #{tpu_custom_call.1} parent=1 // pred_check_branch
      %318 = sbr.rel (0) target = $region45
    $region44: #{tpu_custom_call.1} parent=1 // pred_region
      %319 = dma.done [#allocation3], 128
    $region45: #{tpu_custom_call.1} parent=1 // pred_fallthru
      _
    %320 = vsyncpa [#allocation3], 1

</llo_original>
